<compile_context>
chip_gen: v7x
topology: tpu7x:2x2x1
jax: 0.10.0
libtpu: 0.0.40
codegen_flags: <defaults>
</compile_context>

<pallas_src>
import functools

import jax
import jax.numpy as jnp
from jax.experimental import pallas as pl
from jax.experimental.pallas import tpu as pltpu

LANES = 128
SUBLANES = 8
TILE = SUBLANES * LANES            # 1024 elements = one (8, 128) f32 tile
BLOCK_ROWS_MAX = 4096              # 2 MiB per f32 input buffer per block
LOG_EPS = -27.631021115928547      # log(1e-12): mirrors the module's +1e-12 guard


def _round_up(x, m):
    return ((x + m - 1) // m) * m


def _sublane_multiple(dtype):
    # Minimum second-minor block multiple for a dtype: f32 -> 8, bf16 -> 16, int8 -> 32.
    return max(SUBLANES, 32 // jnp.dtype(dtype).itemsize)


def _int_or_float_pow(x, gamma):
    """x ** gamma; repeated multiplies (VPU) when gamma is a small integer."""
    g = float(gamma)
    if g.is_integer() and 0 <= int(g) <= 8:
        n = int(g)
        if n == 0:
            return jnp.ones_like(x)
        r = x
        for _ in range(n - 1):
            r = r * x
        return r
    return jnp.power(x, g)


def _focal_elementwise(pred, m, gamma, alpha):
    """Per-element focal loss (pred = logits, m = target mask); f32 in/out."""
    e = jnp.exp(-jnp.abs(pred))                     # EUP transcendental #1
    ope = 1.0 + e
    t = jnp.maximum(-pred, 0.0) + jnp.log(ope)      # softplus(-pred) = -log(sigmoid)   EUP #2
    p = jnp.where(pred >= 0.0, 1.0, e) / ope        # sigmoid(pred) (exact divide, no 2nd exp)
    log_p = jnp.maximum(-t, LOG_EPS)                # ~= log(p + 1e-12)
    log_1mp = jnp.maximum(-pred - t, LOG_EPS)       # ~= log(1 - p + 1e-12)
    w_pos = _int_or_float_pow(1.0 - p, gamma)
    w_neg = _int_or_float_pow(p, gamma)
    return ((-alpha) * m * w_pos * log_p
            + (alpha - 1.0) * (1.0 - m) * w_neg * log_1mp)


def _focal_loss_kernel(pred_ref, mask_ref, out_ref, *, gamma, alpha, rows,
                       block_rows, has_tail):
    nstrips = block_rows // SUBLANES
    block_row0 = pl.program_id(0) * block_rows

    def make_strip_body(mask_tail):
        def strip(s, acc):
            r = pl.multiple_of(s * SUBLANES, SUBLANES)
            pred = pred_ref[pl.ds(r, SUBLANES), :].astype(jnp.float32)
            m = mask_ref[pl.ds(r, SUBLANES), :].astype(jnp.float32)
            ls = _focal_elementwise(pred, m, gamma, alpha)
            if mask_tail:
                # `rows` is a multiple of 8, so an 8-row strip is either fully
                # valid or pure block-overhang padding -> one scalar predicate.
                ls = jnp.where(block_row0 + r < rows, ls, 0.0)
            return acc + ls
        return strip

    def run(mask_tail):
        zero = jnp.zeros((SUBLANES, LANES), jnp.float32)
        acc = jax.lax.fori_loop(0, nstrips, make_strip_body(mask_tail), zero,
                                unroll=min(4, nstrips))
        out_ref[...] = acc.reshape(1, SUBLANES, LANES)

    if has_tail:
        is_last = pl.program_id(0) == pl.num_programs(0) - 1

        @pl.when(jnp.logical_not(is_last))
        def _():
            run(False)           # hot path: no masking ops at all

        @pl.when(is_last)
        def _():
            run(True)            # only the last grid step pays the tail mask
    else:
        run(False)


def focal_loss_pallas(pred, mask, gamma=2.0, alpha=0.25):
    """pred, mask: [B, 1, H, W] (float pred; float/int8/bool mask). Scalar f32 loss."""
    assert pred.shape == mask.shape, "pred and mask should have the same shape."
    numel = int(pred.size)
    gamma = float(gamma)
    alpha = float(alpha)

    flat_p = pred.reshape(-1)
    flat_m = mask.reshape(-1)
    if flat_m.dtype == jnp.bool_:
        flat_m = flat_m.astype(jnp.int8)   # stream 1 B/elem; cast to f32 in-kernel
    if flat_p.dtype == jnp.bool_:
        flat_p = flat_p.astype(jnp.float32)

    main = numel - (numel % TILE)          # 1024-aligned prefix -> kernel
    total = jnp.zeros((), jnp.float32)

    if main:
        rows = main // LANES               # multiple of 8
        P = flat_p[:main].reshape(rows, LANES)
        M = flat_m[:main].reshape(rows, LANES)

        row_align = max(_sublane_multiple(P.dtype), _sublane_multiple(M.dtype))
        # Target >= 2 grid steps (both v7x TensorCores), capped at 4096 rows
        # (2 MiB/f32 buffer; 8 MiB double-buffered across both inputs — safe
        # under the v5e 16 MiB scoped-VMEM default without extra flags).
        block_rows = max(row_align,
                         min(BLOCK_ROWS_MAX,
                             _round_up(pl.cdiv(rows, 2), row_align)))
        num_blocks = pl.cdiv(rows, block_rows)
        has_tail = (num_blocks * block_rows) != rows

        kernel = functools.partial(
            _focal_loss_kernel, gamma=gamma, alpha=alpha, rows=rows,
            block_rows=block_rows, has_tail=has_tail)

        in_blk = pl.BlockSpec((block_rows, LANES), lambda i: (i, 0))
        partials = pl.pallas_call(
            kernel,
            out_shape=jax.ShapeDtypeStruct((num_blocks, SUBLANES, LANES),
                                           jnp.float32),
            grid=(num_blocks,),
            in_specs=[in_blk, in_blk],
            out_specs=pl.BlockSpec((1, SUBLANES, LANES), lambda i: (i, 0, 0)),
            compiler_params=pltpu.CompilerParams(
                dimension_semantics=("parallel",)),
        )(P, M)
        total = total + jnp.sum(partials)

    if main != numel:
        # <1024-element ragged tail: tiny plain-JAX epilogue (avoids the full
        # jnp.pad read+write of both inputs through HBM).
        tp = flat_p[main:].astype(jnp.float32)
        tm = flat_m[main:].astype(jnp.float32)
        total = total + jnp.sum(_focal_elementwise(tp, tm, gamma, alpha))

    # num_pos + num_neg == numel, so the denominator is a compile-time constant.
    return total / (float(numel) + 1e-12)


def focal_loss_ref(pred, mask, gamma=2.0, alpha=0.25):
    """Plain-JAX reference mirroring the PyTorch module."""
    pred = pred.astype(jnp.float32)
    mask = mask.astype(jnp.float32)
    p = jax.nn.sigmoid(pred)
    num_pos = jnp.sum(mask)
    num_neg = pred.size - num_pos
    w_pos = (1.0 - p) ** gamma
    w_neg = p ** gamma
    loss_pos = -alpha * mask * w_pos * jnp.log(p + 1e-12)
    loss_neg = -(1.0 - alpha) * (1.0 - mask) * w_neg * jnp.log(1.0 - p + 1e-12)
    return (jnp.sum(loss_pos) + jnp.sum(loss_neg)) / (num_pos + num_neg + 1e-12)


if __name__ == "__main__":
    key = jax.random.PRNGKey(0)
    k1, k2 = jax.random.split(key)

    # [B, 1, H, W]; numel = 3200 -> 3072-element kernel prefix (rows=24, two
    # "parallel" grid blocks, ragged last block exercising the pl.when-gated
    # tail path) + 128-element plain-JAX epilogue.
    B, C, H, W = 2, 1, 40, 40
    pred = jax.random.normal(k1, (B, C, H, W), dtype=jnp.float32)
    mask = (jax.random.uniform(k2, (B, C, H, W)) > 0.5).astype(jnp.float32)

    loss = focal_loss_pallas(pred, mask, gamma=2.0, alpha=0.25)
    loss = jax.block_until_ready(loss)

    ref = focal_loss_ref(pred, mask, gamma=2.0, alpha=0.25)
    assert jnp.allclose(loss, ref, rtol=1e-4, atol=1e-6), (loss, ref)
    print("KERNEL_OK")
</pallas_src>

<mosaic_0001>
module attributes {stable_mosaic.version = 11 : i64} {
  func.func @_focal_loss_kernel(%arg0: i32, %arg1: memref<16x128xf32, #tpu.memory_space<vmem>>, %arg2: memref<16x128xf32, #tpu.memory_space<vmem>>, %arg3: memref<1x8x128xf32, #tpu.memory_space<vmem>>) attributes {dimension_semantics = [#tpu.dimension_semantics<parallel>], iteration_bounds = array<i64: 2>, scalar_prefetch = 0 : i64, scratch_operands = 0 : i64, tpu.core_type = #tpu.core_type<tc>, window_params = [{transform_indices = @transform_0, window_bounds = array<i64: 16, 128>}, {transform_indices = @transform_1, window_bounds = array<i64: 16, 128>}, {transform_indices = @transform_2, window_bounds = array<i64: 1, 8, 128>}]} {
    %c16_i32 = arith.constant 16 : i32
    %0 = arith.muli %arg0, %c16_i32 : i32
    %c1_i32 = arith.constant 1 : i32
    %1 = arith.cmpi eq, %arg0, %c1_i32 : i32
    %true = arith.constant true
    %2 = arith.xori %1, %true : i1
    %3 = arith.extui %2 : i1 to i32
    %c0_i32 = arith.constant 0 : i32
    %4 = arith.cmpi ne, %3, %c0_i32 : i32
    scf.if %4 {
      %cst = arith.constant 0.000000e+00 : f32
      %7 = vector.broadcast %cst : f32 to vector<8x128xf32>
      %c0_i32_1 = arith.constant 0 : i32
      %c8_i32 = arith.constant 8 : i32
      %8 = arith.muli %c0_i32_1, %c8_i32 : i32
      %9 = tpu.assume_multiple %8, 8 : i32
      %10 = arith.index_cast %9 : i32 to index
      %c0 = arith.constant 0 : index
      %11 = vector.load %arg1[%10, %c0] : memref<16x128xf32, #tpu.memory_space<vmem>>, vector<8x128xf32>
      %12 = arith.index_cast %9 : i32 to index
      %c0_2 = arith.constant 0 : index
      %13 = vector.load %arg2[%12, %c0_2] : memref<16x128xf32, #tpu.memory_space<vmem>>, vector<8x128xf32>
      %14 = math.absf %11 : vector<8x128xf32>
      %cst_3 = arith.constant 0.000000e+00 : f32
      %15 = vector.broadcast %cst_3 : f32 to vector<8x128xf32>
      %16 = arith.subf %15, %14 : vector<8x128xf32>
      %17 = math.exp %16 : vector<8x128xf32>
      %cst_4 = arith.constant 1.000000e+00 : f32
      %18 = vector.broadcast %cst_4 : f32 to vector<8x128xf32>
      %19 = arith.addf %18, %17 : vector<8x128xf32>
      %cst_5 = arith.constant 0.000000e+00 : f32
      %20 = vector.broadcast %cst_5 : f32 to vector<8x128xf32>
      %21 = arith.subf %20, %11 : vector<8x128xf32>
      %cst_6 = arith.constant 0.000000e+00 : f32
      %22 = vector.broadcast %cst_6 : f32 to vector<8x128xf32>
      %23 = arith.maximumf %21, %22 : vector<8x128xf32>
      %24 = math.log %19 : vector<8x128xf32>
      %25 = arith.addf %23, %24 : vector<8x128xf32>
      %cst_7 = arith.constant 0.000000e+00 : f32
      %26 = vector.broadcast %cst_7 : f32 to vector<8x128xf32>
      %27 = arith.cmpf oge, %11, %26 : vector<8x128xf32>
      %cst_8 = arith.constant 1.000000e+00 : f32
      %28 = vector.broadcast %cst_8 : f32 to vector<8x128xf32>
      %29 = arith.select %27, %28, %17 : vector<8x128xi1>, vector<8x128xf32>
      %30 = arith.divf %29, %19 : vector<8x128xf32>
      %cst_9 = arith.constant 0.000000e+00 : f32
      %31 = vector.broadcast %cst_9 : f32 to vector<8x128xf32>
      %32 = arith.subf %31, %25 : vector<8x128xf32>
      %cst_10 = arith.constant -27.6310215 : f32
      %33 = vector.broadcast %cst_10 : f32 to vector<8x128xf32>
      %34 = arith.maximumf %32, %33 : vector<8x128xf32>
      %cst_11 = arith.constant 0.000000e+00 : f32
      %35 = vector.broadcast %cst_11 : f32 to vector<8x128xf32>
      %36 = arith.subf %35, %11 : vector<8x128xf32>
      %37 = arith.subf %36, %25 : vector<8x128xf32>
      %cst_12 = arith.constant -27.6310215 : f32
      %38 = vector.broadcast %cst_12 : f32 to vector<8x128xf32>
      %39 = arith.maximumf %37, %38 : vector<8x128xf32>
      %cst_13 = arith.constant 1.000000e+00 : f32
      %40 = vector.broadcast %cst_13 : f32 to vector<8x128xf32>
      %41 = arith.subf %40, %30 : vector<8x128xf32>
      %42 = arith.mulf %41, %41 : vector<8x128xf32>
      %43 = arith.mulf %30, %30 : vector<8x128xf32>
      %cst_14 = arith.constant -2.500000e-01 : f32
      %44 = vector.broadcast %cst_14 : f32 to vector<8x128xf32>
      %45 = arith.mulf %44, %13 : vector<8x128xf32>
      %46 = arith.mulf %45, %42 : vector<8x128xf32>
      %47 = arith.mulf %46, %34 : vector<8x128xf32>
      %cst_15 = arith.constant 1.000000e+00 : f32
      %48 = vector.broadcast %cst_15 : f32 to vector<8x128xf32>
      %49 = arith.subf %48, %13 : vector<8x128xf32>
      %cst_16 = arith.constant -7.500000e-01 : f32
      %50 = vector.broadcast %cst_16 : f32 to vector<8x128xf32>
      %51 = arith.mulf %50, %49 : vector<8x128xf32>
      %52 = arith.mulf %51, %43 : vector<8x128xf32>
      %53 = arith.mulf %52, %39 : vector<8x128xf32>
      %54 = arith.addf %47, %53 : vector<8x128xf32>
      %55 = arith.addf %7, %54 : vector<8x128xf32>
      %c1_i32_17 = arith.constant 1 : i32
      %c8_i32_18 = arith.constant 8 : i32
      %56 = arith.muli %c1_i32_17, %c8_i32_18 : i32
      %57 = tpu.assume_multiple %56, 8 : i32
      %58 = arith.index_cast %57 : i32 to index
      %c0_19 = arith.constant 0 : index
      %59 = vector.load %arg1[%58, %c0_19] : memref<16x128xf32, #tpu.memory_space<vmem>>, vector<8x128xf32>
      %60 = arith.index_cast %57 : i32 to index
      %c0_20 = arith.constant 0 : index
      %61 = vector.load %arg2[%60, %c0_20] : memref<16x128xf32, #tpu.memory_space<vmem>>, vector<8x128xf32>
      %62 = math.absf %59 : vector<8x128xf32>
      %cst_21 = arith.constant 0.000000e+00 : f32
      %63 = vector.broadcast %cst_21 : f32 to vector<8x128xf32>
      %64 = arith.subf %63, %62 : vector<8x128xf32>
      %65 = math.exp %64 : vector<8x128xf32>
      %cst_22 = arith.constant 1.000000e+00 : f32
      %66 = vector.broadcast %cst_22 : f32 to vector<8x128xf32>
      %67 = arith.addf %66, %65 : vector<8x128xf32>
      %cst_23 = arith.constant 0.000000e+00 : f32
      %68 = vector.broadcast %cst_23 : f32 to vector<8x128xf32>
      %69 = arith.subf %68, %59 : vector<8x128xf32>
      %cst_24 = arith.constant 0.000000e+00 : f32
      %70 = vector.broadcast %cst_24 : f32 to vector<8x128xf32>
      %71 = arith.maximumf %69, %70 : vector<8x128xf32>
      %72 = math.log %67 : vector<8x128xf32>
      %73 = arith.addf %71, %72 : vector<8x128xf32>
      %cst_25 = arith.constant 0.000000e+00 : f32
      %74 = vector.broadcast %cst_25 : f32 to vector<8x128xf32>
      %75 = arith.cmpf oge, %59, %74 : vector<8x128xf32>
      %cst_26 = arith.constant 1.000000e+00 : f32
      %76 = vector.broadcast %cst_26 : f32 to vector<8x128xf32>
      %77 = arith.select %75, %76, %65 : vector<8x128xi1>, vector<8x128xf32>
      %78 = arith.divf %77, %67 : vector<8x128xf32>
      %cst_27 = arith.constant 0.000000e+00 : f32
      %79 = vector.broadcast %cst_27 : f32 to vector<8x128xf32>
      %80 = arith.subf %79, %73 : vector<8x128xf32>
      %cst_28 = arith.constant -27.6310215 : f32
      %81 = vector.broadcast %cst_28 : f32 to vector<8x128xf32>
      %82 = arith.maximumf %80, %81 : vector<8x128xf32>
      %cst_29 = arith.constant 0.000000e+00 : f32
      %83 = vector.broadcast %cst_29 : f32 to vector<8x128xf32>
      %84 = arith.subf %83, %59 : vector<8x128xf32>
      %85 = arith.subf %84, %73 : vector<8x128xf32>
      %cst_30 = arith.constant -27.6310215 : f32
      %86 = vector.broadcast %cst_30 : f32 to vector<8x128xf32>
      %87 = arith.maximumf %85, %86 : vector<8x128xf32>
      %cst_31 = arith.constant 1.000000e+00 : f32
      %88 = vector.broadcast %cst_31 : f32 to vector<8x128xf32>
      %89 = arith.subf %88, %78 : vector<8x128xf32>
      %90 = arith.mulf %89, %89 : vector<8x128xf32>
      %91 = arith.mulf %78, %78 : vector<8x128xf32>
      %cst_32 = arith.constant -2.500000e-01 : f32
      %92 = vector.broadcast %cst_32 : f32 to vector<8x128xf32>
      %93 = arith.mulf %92, %61 : vector<8x128xf32>
      %94 = arith.mulf %93, %90 : vector<8x128xf32>
      %95 = arith.mulf %94, %82 : vector<8x128xf32>
      %cst_33 = arith.constant 1.000000e+00 : f32
      %96 = vector.broadcast %cst_33 : f32 to vector<8x128xf32>
      %97 = arith.subf %96, %61 : vector<8x128xf32>
      %cst_34 = arith.constant -7.500000e-01 : f32
      %98 = vector.broadcast %cst_34 : f32 to vector<8x128xf32>
      %99 = arith.mulf %98, %97 : vector<8x128xf32>
      %100 = arith.mulf %99, %91 : vector<8x128xf32>
      %101 = arith.mulf %100, %87 : vector<8x128xf32>
      %102 = arith.addf %95, %101 : vector<8x128xf32>
      %103 = arith.addf %55, %102 : vector<8x128xf32>
      %c2_i32 = arith.constant 2 : i32
      %104 = vector.shape_cast %103 : vector<8x128xf32> to vector<1x8x128xf32>
      %c0_35 = arith.constant 0 : index
      %c0_36 = arith.constant 0 : index
      %c0_37 = arith.constant 0 : index
      %105 = vector.load %arg3[%c0_35, %c0_36, %c0_37] : memref<1x8x128xf32, #tpu.memory_space<vmem>>, vector<1x8x128xf32>
      tpu.vector_store %arg3[%c0_35, %c0_36, %c0_37], %104 {strides = array<i32>} : memref<1x8x128xf32, #tpu.memory_space<vmem>>, vector<1x8x128xf32>,
    } else {
    }
    %5 = arith.extui %1 : i1 to i32
    %c0_i32_0 = arith.constant 0 : i32
    %6 = arith.cmpi ne, %5, %c0_i32_0 : i32
    scf.if %6 {
      %cst = arith.constant 0.000000e+00 : f32
      %7 = vector.broadcast %cst : f32 to vector<8x128xf32>
      %c0_i32_1 = arith.constant 0 : i32
      %c8_i32 = arith.constant 8 : i32
      %8 = arith.muli %c0_i32_1, %c8_i32 : i32
      %9 = tpu.assume_multiple %8, 8 : i32
      %10 = arith.index_cast %9 : i32 to index
      %c0 = arith.constant 0 : index
      %11 = vector.load %arg1[%10, %c0] : memref<16x128xf32, #tpu.memory_space<vmem>>, vector<8x128xf32>
      %12 = arith.index_cast %9 : i32 to index
      %c0_2 = arith.constant 0 : index
      %13 = vector.load %arg2[%12, %c0_2] : memref<16x128xf32, #tpu.memory_space<vmem>>, vector<8x128xf32>
      %14 = math.absf %11 : vector<8x128xf32>
      %cst_3 = arith.constant 0.000000e+00 : f32
      %15 = vector.broadcast %cst_3 : f32 to vector<8x128xf32>
      %16 = arith.subf %15, %14 : vector<8x128xf32>
      %17 = math.exp %16 : vector<8x128xf32>
      %cst_4 = arith.constant 1.000000e+00 : f32
      %18 = vector.broadcast %cst_4 : f32 to vector<8x128xf32>
      %19 = arith.addf %18, %17 : vector<8x128xf32>
      %cst_5 = arith.constant 0.000000e+00 : f32
      %20 = vector.broadcast %cst_5 : f32 to vector<8x128xf32>
      %21 = arith.subf %20, %11 : vector<8x128xf32>
      %cst_6 = arith.constant 0.000000e+00 : f32
      %22 = vector.broadcast %cst_6 : f32 to vector<8x128xf32>
      %23 = arith.maximumf %21, %22 : vector<8x128xf32>
      %24 = math.log %19 : vector<8x128xf32>
      %25 = arith.addf %23, %24 : vector<8x128xf32>
      %cst_7 = arith.constant 0.000000e+00 : f32
      %26 = vector.broadcast %cst_7 : f32 to vector<8x128xf32>
      %27 = arith.cmpf oge, %11, %26 : vector<8x128xf32>
      %cst_8 = arith.constant 1.000000e+00 : f32
      %28 = vector.broadcast %cst_8 : f32 to vector<8x128xf32>
      %29 = arith.select %27, %28, %17 : vector<8x128xi1>, vector<8x128xf32>
      %30 = arith.divf %29, %19 : vector<8x128xf32>
      %cst_9 = arith.constant 0.000000e+00 : f32
      %31 = vector.broadcast %cst_9 : f32 to vector<8x128xf32>
      %32 = arith.subf %31, %25 : vector<8x128xf32>
      %cst_10 = arith.constant -27.6310215 : f32
      %33 = vector.broadcast %cst_10 : f32 to vector<8x128xf32>
      %34 = arith.maximumf %32, %33 : vector<8x128xf32>
      %cst_11 = arith.constant 0.000000e+00 : f32
      %35 = vector.broadcast %cst_11 : f32 to vector<8x128xf32>
      %36 = arith.subf %35, %11 : vector<8x128xf32>
      %37 = arith.subf %36, %25 : vector<8x128xf32>
      %cst_12 = arith.constant -27.6310215 : f32
      %38 = vector.broadcast %cst_12 : f32 to vector<8x128xf32>
      %39 = arith.maximumf %37, %38 : vector<8x128xf32>
      %cst_13 = arith.constant 1.000000e+00 : f32
      %40 = vector.broadcast %cst_13 : f32 to vector<8x128xf32>
      %41 = arith.subf %40, %30 : vector<8x128xf32>
      %42 = arith.mulf %41, %41 : vector<8x128xf32>
      %43 = arith.mulf %30, %30 : vector<8x128xf32>
      %cst_14 = arith.constant -2.500000e-01 : f32
      %44 = vector.broadcast %cst_14 : f32 to vector<8x128xf32>
      %45 = arith.mulf %44, %13 : vector<8x128xf32>
      %46 = arith.mulf %45, %42 : vector<8x128xf32>
      %47 = arith.mulf %46, %34 : vector<8x128xf32>
      %cst_15 = arith.constant 1.000000e+00 : f32
      %48 = vector.broadcast %cst_15 : f32 to vector<8x128xf32>
      %49 = arith.subf %48, %13 : vector<8x128xf32>
      %cst_16 = arith.constant -7.500000e-01 : f32
      %50 = vector.broadcast %cst_16 : f32 to vector<8x128xf32>
      %51 = arith.mulf %50, %49 : vector<8x128xf32>
      %52 = arith.mulf %51, %43 : vector<8x128xf32>
      %53 = arith.mulf %52, %39 : vector<8x128xf32>
      %54 = arith.addf %47, %53 : vector<8x128xf32>
      %55 = arith.addi %0, %9 : i32
      %c24_i32 = arith.constant 24 : i32
      %56 = arith.cmpi slt, %55, %c24_i32 : i32
      %cst_17 = arith.constant 0.000000e+00 : f32
      %57 = vector.broadcast %cst_17 : f32 to vector<8x128xf32>
      %58 = arith.select %56, %54, %57 : vector<8x128xf32>
      %59 = arith.addf %7, %58 : vector<8x128xf32>
      %c1_i32_18 = arith.constant 1 : i32
      %c8_i32_19 = arith.constant 8 : i32
      %60 = arith.muli %c1_i32_18, %c8_i32_19 : i32
      %61 = tpu.assume_multiple %60, 8 : i32
      %62 = arith.index_cast %61 : i32 to index
      %c0_20 = arith.constant 0 : index
      %63 = vector.load %arg1[%62, %c0_20] : memref<16x128xf32, #tpu.memory_space<vmem>>, vector<8x128xf32>
      %64 = arith.index_cast %61 : i32 to index
      %c0_21 = arith.constant 0 : index
      %65 = vector.load %arg2[%64, %c0_21] : memref<16x128xf32, #tpu.memory_space<vmem>>, vector<8x128xf32>
      %66 = math.absf %63 : vector<8x128xf32>
      %cst_22 = arith.constant 0.000000e+00 : f32
      %67 = vector.broadcast %cst_22 : f32 to vector<8x128xf32>
      %68 = arith.subf %67, %66 : vector<8x128xf32>
      %69 = math.exp %68 : vector<8x128xf32>
      %cst_23 = arith.constant 1.000000e+00 : f32
      %70 = vector.broadcast %cst_23 : f32 to vector<8x128xf32>
      %71 = arith.addf %70, %69 : vector<8x128xf32>
      %cst_24 = arith.constant 0.000000e+00 : f32
      %72 = vector.broadcast %cst_24 : f32 to vector<8x128xf32>
      %73 = arith.subf %72, %63 : vector<8x128xf32>
      %cst_25 = arith.constant 0.000000e+00 : f32
      %74 = vector.broadcast %cst_25 : f32 to vector<8x128xf32>
      %75 = arith.maximumf %73, %74 : vector<8x128xf32>
      %76 = math.log %71 : vector<8x128xf32>
      %77 = arith.addf %75, %76 : vector<8x128xf32>
      %cst_26 = arith.constant 0.000000e+00 : f32
      %78 = vector.broadcast %cst_26 : f32 to vector<8x128xf32>
      %79 = arith.cmpf oge, %63, %78 : vector<8x128xf32>
      %cst_27 = arith.constant 1.000000e+00 : f32
      %80 = vector.broadcast %cst_27 : f32 to vector<8x128xf32>
      %81 = arith.select %79, %80, %69 : vector<8x128xi1>, vector<8x128xf32>
      %82 = arith.divf %81, %71 : vector<8x128xf32>
      %cst_28 = arith.constant 0.000000e+00 : f32
      %83 = vector.broadcast %cst_28 : f32 to vector<8x128xf32>
      %84 = arith.subf %83, %77 : vector<8x128xf32>
      %cst_29 = arith.constant -27.6310215 : f32
      %85 = vector.broadcast %cst_29 : f32 to vector<8x128xf32>
      %86 = arith.maximumf %84, %85 : vector<8x128xf32>
      %cst_30 = arith.constant 0.000000e+00 : f32
      %87 = vector.broadcast %cst_30 : f32 to vector<8x128xf32>
      %88 = arith.subf %87, %63 : vector<8x128xf32>
      %89 = arith.subf %88, %77 : vector<8x128xf32>
      %cst_31 = arith.constant -27.6310215 : f32
      %90 = vector.broadcast %cst_31 : f32 to vector<8x128xf32>
      %91 = arith.maximumf %89, %90 : vector<8x128xf32>
      %cst_32 = arith.constant 1.000000e+00 : f32
      %92 = vector.broadcast %cst_32 : f32 to vector<8x128xf32>
      %93 = arith.subf %92, %82 : vector<8x128xf32>
      %94 = arith.mulf %93, %93 : vector<8x128xf32>
      %95 = arith.mulf %82, %82 : vector<8x128xf32>
      %cst_33 = arith.constant -2.500000e-01 : f32
      %96 = vector.broadcast %cst_33 : f32 to vector<8x128xf32>
      %97 = arith.mulf %96, %65 : vector<8x128xf32>
      %98 = arith.mulf %97, %94 : vector<8x128xf32>
      %99 = arith.mulf %98, %86 : vector<8x128xf32>
      %cst_34 = arith.constant 1.000000e+00 : f32
      %100 = vector.broadcast %cst_34 : f32 to vector<8x128xf32>
      %101 = arith.subf %100, %65 : vector<8x128xf32>
      %cst_35 = arith.constant -7.500000e-01 : f32
      %102 = vector.broadcast %cst_35 : f32 to vector<8x128xf32>
      %103 = arith.mulf %102, %101 : vector<8x128xf32>
      %104 = arith.mulf %103, %95 : vector<8x128xf32>
      %105 = arith.mulf %104, %91 : vector<8x128xf32>
      %106 = arith.addf %99, %105 : vector<8x128xf32>
      %107 = arith.addi %0, %61 : i32
      %c24_i32_36 = arith.constant 24 : i32
      %108 = arith.cmpi slt, %107, %c24_i32_36 : i32
      %cst_37 = arith.constant 0.000000e+00 : f32
      %109 = vector.broadcast %cst_37 : f32 to vector<8x128xf32>
      %110 = arith.select %108, %106, %109 : vector<8x128xf32>
      %111 = arith.addf %59, %110 : vector<8x128xf32>
      %c2_i32 = arith.constant 2 : i32
      %112 = vector.shape_cast %111 : vector<8x128xf32> to vector<1x8x128xf32>
      %c0_38 = arith.constant 0 : index
      %c0_39 = arith.constant 0 : index
      %c0_40 = arith.constant 0 : index
      %113 = vector.load %arg3[%c0_38, %c0_39, %c0_40] : memref<1x8x128xf32, #tpu.memory_space<vmem>>, vector<1x8x128xf32>
      tpu.vector_store %arg3[%c0_38, %c0_39, %c0_40], %112 {strides = array<i32>} : memref<1x8x128xf32, #tpu.memory_space<vmem>>, vector<1x8x128xf32>,
    } else {
    }
    return
  }
  func.func @transform_0(%arg0: i32) -> (i32, i32) {
    %c0_i32 = arith.constant 0 : i32
    %c0_i32_0 = arith.constant 0 : i32
    return %arg0, %c0_i32 : i32, i32
  }
  func.func @transform_1(%arg0: i32) -> (i32, i32) {
    %c0_i32 = arith.constant 0 : i32
    %c0_i32_0 = arith.constant 0 : i32
    return %arg0, %c0_i32 : i32, i32
  }
  func.func @transform_2(%arg0: i32) -> (i32, i32, i32) {
    %c0_i32 = arith.constant 0 : i32
    %c0_i32_0 = arith.constant 0 : i32
    %c0_i32_1 = arith.constant 0 : i32
    return %arg0, %c0_i32, %c0_i32_0 : i32, i32, i32
  }
}

</mosaic_0001>

<llo_original>
// kernel: tpu_custom_call.1
$region0: #{tpu_custom_call.1}
  #allocation0 [shape = 'u32[]', space=smem, size = 0x4, offset = 0x4, fixed_abs, tag = 'smem constant byte address 0x4 - core index']
  #allocation1 [shape = 'u32[144,128]{1,0:T(1,128)}', space=vmem, size = 0x12000, scoped, tag = 'internal scratch']
  %s0 = inlined_call_operand.hbm [shape: f32[24,128], index: 0, kind: input, shape index: {}]
  %s1 = inlined_call_operand.hbm [shape: f32[24,128], index: 1, kind: input, shape index: {}]
  %s2 = inlined_call_operand.hbm [shape: f32[2,8,128], index: 2, kind: output, shape index: {}]
  %s3 = sld [smem:[#allocation0]]
  $region57: #{tpu_custom_call.1} parent=0
    _
  %s5 = ssub.s32 1, %s3
  %s6 = scalar_select 0, %s5, %s3
  $region1: #{tpu_custom_call.1} parent=0
    #allocation2 [shape = 'u8[16384]{0}', space=vmem, size = 0x4000, scoped, tag = 'input window, operand 0']
    #allocation3 [shape = 's32[2]{0}', space=sflag, size = 0x8, scoped, tag = 'scoped memory for tpu_custom_call.1']
    #allocation4 [shape = 's32[2]{0}', space=sflag, size = 0x8, scoped, tag = 'scoped memory for tpu_custom_call.1']
    #allocation5 [shape = 'u8[16384]{0}', space=vmem, size = 0x4000, scoped, tag = 'input window, operand 1']
    #allocation6 [shape = 's32[2]{0}', space=sflag, size = 0x8, scoped, tag = 'scoped memory for tpu_custom_call.1']
    #allocation7 [shape = 'u8[8192]{0}', space=vmem, size = 0x2000, scoped, tag = 'output window, operand 0']
    %7 = vsyncpa [#allocation3], 0
    %s8 = scalar_lea.sflag [#allocation3], 1
    %9 = vsyncpa %s8, 0
    %10 = vsyncpa [#allocation6], 0
    %s11 = scalar_lea.sflag [#allocation6], 1
    %12 = vsyncpa %s11, 0
    %13 = vsyncpa [#allocation4], 0
    %s14 = scalar_lea.sflag [#allocation4], 1
    %15 = vsyncpa %s14, 0
    loop: start=0, step=1, limit=4
    $region2: #{tpu_custom_call.1} parent=1 // loop_pre_header
      _
    $region3: #{tpu_custom_call.1} parent=1 // loop_header
      %s17 = sphi 0, %s21
      %p18 = scmp.ge.s32.totalorder %s17, 4
      %s27 = sphi 0, %s29
      %s30 = sphi 0, %s27
      %s31 = sphi 0, %s30
      %s47 = sphi 0, %s31
      %s53 = sphi 0, %s55
      %s56 = sphi 0, %s53
      %s57 = sphi 0, %s56
      %s73 = sphi 0, %s57
      %s79 = sphi 0, %s81
      %s82 = sphi 0, %s79
      %s83 = sphi 0, %s82
      %s99 = sphi 0, %s83
    $region4: #{tpu_custom_call.1} parent=1 // loop_header_branch
      %20 = sbr.rel (%p18) target = $region8
    $region5: #{tpu_custom_call.1} parent=1 // loop_body
      %s22 = ssub.s32 %s17, 1
      %s23 = ssub.s32 %s17, 2
      %s24 = sadd.s32 %s17, 1
      %s25 = ssub.s32 %s17, %s24
      %p26 = scmp.eq.s32.totalorder %s25, 0
      %s28 = sadd.s32 %s27, 1
      %s29 = scalar_select %p26, %s27, %s28
      %p32 = pneg %p26
      %p33 = scmp.eq.s32.totalorder %s17, 1
      %p34 = por %p32, %p33
      %p35 = scmp.ne.s32.totalorder %s27, %s30
      %p36 = scmp.eq.s32.totalorder %s17, 0
      %p37 = por %p35, %p36
      %p38 = scmp.ne.s32.totalorder %s27, %s30
      %p39 = scmp.eq.s32.totalorder %s22, 1
      %p40 = por %p38, %p39
      %p41 = scmp.ne.s32.totalorder %s30, %s31
      %p42 = scmp.eq.s32.totalorder %s22, 0
      %p43 = por %p41, %p42
      %p44 = scmp.ne.s32.totalorder %s30, %s31
      %p45 = scmp.eq.s32.totalorder %s23, 1
      %p46 = por %p44, %p45
      %p48 = scmp.ne.s32.totalorder %s31, %s47
      %p49 = scmp.eq.s32.totalorder %s23, 0
      %p50 = por %p48, %p49
      %s51 = ssub.s32 %s17, %s24
      %p52 = scmp.eq.s32.totalorder %s51, 0
      %s54 = sadd.s32 %s53, 1
      %s55 = scalar_select %p52, %s53, %s54
      %p58 = pneg %p52
      %p59 = scmp.eq.s32.totalorder %s17, 1
      %p60 = por %p58, %p59
      %p61 = scmp.ne.s32.totalorder %s53, %s56
      %p62 = scmp.eq.s32.totalorder %s17, 0
      %p63 = por %p61, %p62
      %p64 = scmp.ne.s32.totalorder %s53, %s56
      %p65 = scmp.eq.s32.totalorder %s22, 1
      %p66 = por %p64, %p65
      %p67 = scmp.ne.s32.totalorder %s56, %s57
      %p68 = scmp.eq.s32.totalorder %s22, 0
      %p69 = por %p67, %p68
      %p70 = scmp.ne.s32.totalorder %s56, %s57
      %p71 = scmp.eq.s32.totalorder %s23, 1
      %p72 = por %p70, %p71
      %p74 = scmp.ne.s32.totalorder %s57, %s73
      %p75 = scmp.eq.s32.totalorder %s23, 0
      %p76 = por %p74, %p75
      %s77 = ssub.s32 %s17, %s24
      %p78 = scmp.eq.s32.totalorder %s77, 0
      %s80 = sadd.s32 %s79, 1
      %s81 = scalar_select %p78, %s79, %s80
      %p84 = pneg %p78
      %p85 = scmp.eq.s32.totalorder %s17, 1
      %p86 = por %p84, %p85
      %p87 = scmp.ne.s32.totalorder %s79, %s82
      %p88 = scmp.eq.s32.totalorder %s17, 0
      %p89 = por %p87, %p88
      %p90 = scmp.ne.s32.totalorder %s79, %s82
      %p91 = scmp.eq.s32.totalorder %s22, 1
      %p92 = por %p90, %p91
      %p93 = scmp.ne.s32.totalorder %s82, %s83
      %p94 = scmp.eq.s32.totalorder %s22, 0
      %p95 = por %p93, %p94
      %p96 = scmp.ne.s32.totalorder %s82, %s83
      %p97 = scmp.eq.s32.totalorder %s23, 1
      %p98 = por %p96, %p97
      %p100 = scmp.ne.s32.totalorder %s83, %s99
      %p101 = scmp.eq.s32.totalorder %s23, 0
      %p102 = por %p100, %p101
      %p103 = scmp.le.s32.totalorder 1, %s17
      %p104 = scmp.lt.s32.totalorder %s17, 3
      %p105 = pnand %p103, %p104
      %p106 = pneg %p105
      // Predicated region
      $region9: #{tpu_custom_call.1} parent=5 // pred_check
        _
      $region10: #{tpu_custom_call.1} parent=5 // pred_check_branch
        %108 = sbr.rel (%p105) target = $region12
      $region11: #{tpu_custom_call.1} parent=5 // pred_region
        %s109 = ssub.s32 %s17, 1
      $region12: #{tpu_custom_call.1} parent=5 // pred_fallthru
        _
      %p110 = scmp.lt.s32.totalorder %s17, 2
      // Predicated region
      $region13: #{tpu_custom_call.1} parent=5 // pred_check
        %p111 = pneg %p110
      $region14: #{tpu_custom_call.1} parent=5 // pred_check_branch
        %113 = sbr.rel (%p111) target = $region16
      $region15: #{tpu_custom_call.1} parent=5 // pred_region
        // Predicated region
        $region17: #{tpu_custom_call.1} parent=15 // pred_check
          %p114 = pneg %p37
        $region18: #{tpu_custom_call.1} parent=15 // pred_check_branch
          %116 = sbr.rel (%p114) target = $region20
        $region19: #{tpu_custom_call.1} parent=15 // pred_region
          %s117 = sand.u32 %s27, 1
          %s118 = scalar_lea.sflag [#allocation3], %s117
          %s119 = sand.u32 %s27, 1
          %s120 = smul.addr %s119, 16
          %s121 = scalar_lea.vmem [#allocation2], %s120
          %s122 = smul.u32 2, %s17
          %s123 = ssub.s32 3, %s122
          %p124 = scmp.lt.s32.totalorder %s123, 2
          %s125 = scalar_select %p124, %s123, 2
          %s126 = smul.u32 128, %s125
          %s128 = ssub.s32 256, %s126
          %129 = vsyncadd %s118, %s128
          %p130 = scmp.ne.s32.totalorder 0, %s126
          %s131 = smul.addr %s122, 128
          %s132 = scalar_lea.hbm %s0, %s131
          %s133 = smul.u32 8, %s125
          %s134 = sshll.u32 %s121, 4
          %s135 = int_to_ptr.vmem [resolvable:$true] %s134
          %s136 = sshll.u32 %s133, 4
          %140 = dma.hbm_to_vmem [thread:$0]  (%p130), %s132, %s136, %s135, %s118, 128, 128, 8
        $region20: #{tpu_custom_call.1} parent=15 // pred_fallthru
          _
        // Predicated region
        $region21: #{tpu_custom_call.1} parent=15 // pred_check
          %p141 = pneg %p63
        $region22: #{tpu_custom_call.1} parent=15 // pred_check_branch
          %143 = sbr.rel (%p141) target = $region24
        $region23: #{tpu_custom_call.1} parent=15 // pred_region
          %s144 = sand.u32 %s53, 1
          %s145 = scalar_lea.sflag [#allocation6], %s144
          %s146 = sand.u32 %s53, 1
          %s147 = smul.addr %s146, 16
          %s148 = scalar_lea.vmem [#allocation5], %s147
          %s149 = smul.u32 2, %s17
          %s150 = ssub.s32 3, %s149
          %p151 = scmp.lt.s32.totalorder %s150, 2
          %s152 = scalar_select %p151, %s150, 2
          %s153 = smul.u32 128, %s152
          %s155 = ssub.s32 256, %s153
          %156 = vsyncadd %s145, %s155
          %p157 = scmp.ne.s32.totalorder 0, %s153
          %s158 = smul.addr %s149, 128
          %s159 = scalar_lea.hbm %s1, %s158
          %s160 = smul.u32 8, %s152
          %s161 = sshll.u32 %s148, 4
          %s162 = int_to_ptr.vmem [resolvable:$true] %s161
          %s163 = sshll.u32 %s160, 4
          %167 = dma.hbm_to_vmem [thread:$0]  (%p157), %s159, %s163, %s162, %s145, 128, 128, 8
        $region24: #{tpu_custom_call.1} parent=15 // pred_fallthru
          _
      $region16: #{tpu_custom_call.1} parent=5 // pred_fallthru
        _
      %p168 = scmp.le.s32.totalorder 1, %s17
      %p169 = scmp.lt.s32.totalorder %s17, 3
      %p170 = pnand %p168, %p169
      %p171 = pneg %p170
      // Predicated region
      $region25: #{tpu_custom_call.1} parent=5 // pred_check
        _
      $region26: #{tpu_custom_call.1} parent=5 // pred_check_branch
        %173 = sbr.rel (%p170) target = $region28
      $region27: #{tpu_custom_call.1} parent=5 // pred_region
        %s174 = ssub.s32 %s17, 1
        %s175 = sand.u32 %s30, 1
        %s176 = scalar_lea.sflag [#allocation3], %s175
        %s177 = sand.u32 %s30, 1
        %s178 = smul.addr %s177, 16
        %s179 = scalar_lea.vmem [#allocation2], %s178
        // Predicated region
        $region29: #{tpu_custom_call.1} parent=27 // pred_check
          %p180 = pneg %p43
        $region30: #{tpu_custom_call.1} parent=27 // pred_check_branch
          %182 = sbr.rel (%p180) target = $region32
        $region31: #{tpu_custom_call.1} parent=27 // pred_region
          %183 = dma.done %s176, 256
        $region32: #{tpu_custom_call.1} parent=27 // pred_fallthru
          _
        %s184 = sand.u32 %s56, 1
        %s185 = scalar_lea.sflag [#allocation6], %s184
        %s186 = sand.u32 %s56, 1
        %s187 = smul.addr %s186, 16
        %s188 = scalar_lea.vmem [#allocation5], %s187
        // Predicated region
        $region33: #{tpu_custom_call.1} parent=27 // pred_check
          %p189 = pneg %p69
        $region34: #{tpu_custom_call.1} parent=27 // pred_check_branch
          %191 = sbr.rel (%p189) target = $region36
        $region35: #{tpu_custom_call.1} parent=27 // pred_region
          %192 = dma.done %s185, 256
        $region36: #{tpu_custom_call.1} parent=27 // pred_fallthru
          _
        %s193 = sand.u32 %s30, 1
        %s194 = scalar_lea.sflag [#allocation3], %s193
        %s195 = sand.u32 %s30, 1
        %s196 = smul.addr %s195, 16
        %s197 = scalar_lea.vmem [#allocation2], %s196
        %p198 = pneg %p43
        %p199 = pneg %p40
        %s200 = sand.u32 %s56, 1
        %s201 = scalar_lea.sflag [#allocation6], %s200
        %s202 = sand.u32 %s56, 1
        %s203 = smul.addr %s202, 16
        %s204 = scalar_lea.vmem [#allocation5], %s203
        %p205 = pneg %p69
        %p206 = pneg %p66
        %p207 = pneg %p95
        %p208 = pneg %p92
        %s209 = sand.u32 %s82, 1
        %s210 = scalar_lea.sflag [#allocation4], %s209
        %s211 = sand.u32 %s82, 1
        %s212 = smul.addr %s211, 8
        %s213 = scalar_lea.vmem [#allocation7], %s212
        %s214 = smul.u32 2, %s22
        %s215 = ssub.s32 3, %s214
        %p216 = scmp.lt.s32.totalorder %s215, 2
        %s217 = scalar_select %p216, %s215, 2
        %s218 = smul.u32 128, %s217
        %s219 = smul.u32 2, %s22
        %s220 = ssub.s32 3, %s219
        %p221 = scmp.lt.s32.totalorder %s220, 2
        %s222 = scalar_select %p221, %s220, 2
        %s223 = smul.u32 128, %s222
        %s224 = smul.u32 %s22, 16
        %p225 = scmp.eq.s32.totalorder %s22, 1
        %p226 = scmp.ne.s32.totalorder %s22, 1
        // Predicated region
        $region37: #{tpu_custom_call.1} parent=27 // pred_check
          %p227 = pneg %p226
        $region38: #{tpu_custom_call.1} parent=27 // pred_check_branch
          %229 = sbr.rel (%p227) target = $region40
        $region39: #{tpu_custom_call.1} parent=27 // pred_region
          %v230 = vld [vmem:[%s179] sm:$0xff]
          %v231 = vld [vmem:[%s188] sm:$0xff]
          %v232 = vand.u32 2147483647, %v230
          %v233 = vsub.f32 0.0, %v232
          %v234 = vmul.f32 %v233, 1.442695
          %v235 = vpow.pop %v234
          %v236 = vadd.f32 %v235, 1.0
          %v237 = vsub.f32 0.0, %v230
          %v238 = vmax.f32 %v237, 0.0
          %v239 = vlog2.pop %v236
          %v240 = vmul.f32 %v239, 0.6931472
          %v241 = vadd.f32 %v238, %v240
          %vm242 = vcmp.ge.f32.partialorder %v230, 0.0
          %v243 = vsel %vm242, 1.0, %v235
          %v244 = vrcp.pop %v236
          %v245 = vmul.f32 %v243, %v244
          %v246 = vsub.f32 0.0, %v241
          %v247 = vmax.f32 %v246, -27.631021
          %v248 = vsub.f32 %v237, %v241
          %v249 = vmax.f32 %v248, -27.631021
          %v250 = vsub.f32 1.0, %v245
          %v251 = vmul.f32 %v250, %v250
          %v252 = vmul.f32 %v245, %v245
          %v253 = vmul.f32 %v231, -0.25
          %v254 = vmul.f32 %v253, %v251
          %v255 = vmul.f32 %v254, %v247
          %v256 = vsub.f32 1.0, %v231
          %v257 = vmul.f32 %v256, -0.75
          %v258 = vmul.f32 %v257, %v252
          %v259 = vmul.f32 %v258, %v249
          %v260 = vadd.f32 %v255, %v259
          %v261 = vadd.f32 %v260, 0.0
          %s262 = scalar_lea.vmem %s179, 8 [#allocation2]
          %v263 = vld [vmem:[%s262] sm:$0xff]
          %s264 = scalar_lea.vmem %s188, 8 [#allocation5]
          %v265 = vld [vmem:[%s264] sm:$0xff]
          %v266 = vand.u32 2147483647, %v263
          %v267 = vsub.f32 0.0, %v266
          %v268 = vmul.f32 %v267, 1.442695
          %v269 = vpow.pop %v268
          %v270 = vadd.f32 %v269, 1.0
          %v271 = vsub.f32 0.0, %v263
          %v272 = vmax.f32 %v271, 0.0
          %v273 = vlog2.pop %v270
          %v274 = vmul.f32 %v273, 0.6931472
          %v275 = vadd.f32 %v272, %v274
          %vm276 = vcmp.ge.f32.partialorder %v263, 0.0
          %v277 = vsel %vm276, 1.0, %v269
          %v278 = vrcp.pop %v270
          %v279 = vmul.f32 %v277, %v278
          %v280 = vsub.f32 0.0, %v275
          %v281 = vmax.f32 %v280, -27.631021
          %v282 = vsub.f32 %v271, %v275
          %v283 = vmax.f32 %v282, -27.631021
          %v284 = vsub.f32 1.0, %v279
          %v285 = vmul.f32 %v284, %v284
          %v286 = vmul.f32 %v279, %v279
          %v287 = vmul.f32 %v265, -0.25
          %v288 = vmul.f32 %v287, %v285
          %v289 = vmul.f32 %v288, %v281
          %v290 = vsub.f32 1.0, %v265
          %v291 = vmul.f32 %v290, -0.75
          %v292 = vmul.f32 %v291, %v286
          %v293 = vmul.f32 %v292, %v283
          %v294 = vadd.f32 %v289, %v293
          %v295 = vadd.f32 %v261, %v294
          %296 = vst [vmem:[%s213] sm:$0xff] %v295
        $region40: #{tpu_custom_call.1} parent=27 // pred_fallthru
          _
        // Predicated region
        $region41: #{tpu_custom_call.1} parent=27 // pred_check
          %p297 = pneg %p225
        $region42: #{tpu_custom_call.1} parent=27 // pred_check_branch
          %299 = sbr.rel (%p297) target = $region44
        $region43: #{tpu_custom_call.1} parent=27 // pred_region
          %v300 = vld [vmem:[%s179] sm:$0xff]
          %v301 = vld [vmem:[%s188] sm:$0xff]
          %v302 = vand.u32 2147483647, %v300
          %v303 = vsub.f32 0.0, %v302
          %v304 = vmul.f32 %v303, 1.442695
          %v305 = vpow.pop %v304
          %v306 = vadd.f32 %v305, 1.0
          %v307 = vsub.f32 0.0, %v300
          %v308 = vmax.f32 %v307, 0.0
          %v309 = vlog2.pop %v306
          %v310 = vmul.f32 %v309, 0.6931472
          %v311 = vadd.f32 %v308, %v310
          %vm312 = vcmp.ge.f32.partialorder %v300, 0.0
          %v313 = vsel %vm312, 1.0, %v305
          %v314 = vrcp.pop %v306
          %v315 = vmul.f32 %v313, %v314
          %v316 = vsub.f32 0.0, %v311
          %v317 = vmax.f32 %v316, -27.631021
          %v318 = vsub.f32 %v307, %v311
          %v319 = vmax.f32 %v318, -27.631021
          %v320 = vsub.f32 1.0, %v315
          %v321 = vmul.f32 %v320, %v320
          %v322 = vmul.f32 %v315, %v315
          %v323 = vmul.f32 %v301, -0.25
          %v324 = vmul.f32 %v323, %v321
          %v325 = vmul.f32 %v324, %v317
          %v326 = vsub.f32 1.0, %v301
          %v327 = vmul.f32 %v326, -0.75
          %v328 = vmul.f32 %v327, %v322
          %v329 = vmul.f32 %v328, %v319
          %v330 = vadd.f32 %v325, %v329
          %s331 = sadd.s32 %s224, 0
          %p332 = scmp.lt.s32.totalorder %s331, 24
          %s333 = scalar_select %p332, 1, 0
          %v334 = vstv %s333
          %vm335 = vcmp.eq.s32.totalorder %v334, 1
          %v336 = vsel %vm335, %v330, 0.0
          %v337 = vadd.f32 %v336, 0.0
          %s338 = scalar_lea.vmem %s179, 8 [#allocation2]
          %v339 = vld [vmem:[%s338] sm:$0xff]
          %s340 = scalar_lea.vmem %s188, 8 [#allocation5]
          %v341 = vld [vmem:[%s340] sm:$0xff]
          %v342 = vand.u32 2147483647, %v339
          %v343 = vsub.f32 0.0, %v342
          %v344 = vmul.f32 %v343, 1.442695
          %v345 = vpow.pop %v344
          %v346 = vadd.f32 %v345, 1.0
          %v347 = vsub.f32 0.0, %v339
          %v348 = vmax.f32 %v347, 0.0
          %v349 = vlog2.pop %v346
          %v350 = vmul.f32 %v349, 0.6931472
          %v351 = vadd.f32 %v348, %v350
          %vm352 = vcmp.ge.f32.partialorder %v339, 0.0
          %v353 = vsel %vm352, 1.0, %v345
          %v354 = vrcp.pop %v346
          %v355 = vmul.f32 %v353, %v354
          %v356 = vsub.f32 0.0, %v351
          %v357 = vmax.f32 %v356, -27.631021
          %v358 = vsub.f32 %v347, %v351
          %v359 = vmax.f32 %v358, -27.631021
          %v360 = vsub.f32 1.0, %v355
          %v361 = vmul.f32 %v360, %v360
          %v362 = vmul.f32 %v355, %v355
          %v363 = vmul.f32 %v341, -0.25
          %v364 = vmul.f32 %v363, %v361
          %v365 = vmul.f32 %v364, %v357
          %v366 = vsub.f32 1.0, %v341
          %v367 = vmul.f32 %v366, -0.75
          %v368 = vmul.f32 %v367, %v362
          %v369 = vmul.f32 %v368, %v359
          %v370 = vadd.f32 %v365, %v369
          %s371 = sadd.s32 %s224, 8
          %p372 = scmp.lt.s32.totalorder %s371, 24
          %s373 = scalar_select %p372, 1, 0
          %v374 = vstv %s373
          %vm375 = vcmp.eq.s32.totalorder %v374, 1
          %v376 = vsel %vm375, %v370, 0.0
          %v377 = vadd.f32 %v337, %v376
          %378 = vst [vmem:[%s213] sm:$0xff] %v377
        $region44: #{tpu_custom_call.1} parent=27 // pred_fallthru
          _
        %s379 = sand.u32 %s82, 1
        %s380 = scalar_lea.sflag [#allocation4], %s379
        %s381 = sand.u32 %s82, 1
        %s382 = smul.addr %s381, 8
        %s383 = scalar_lea.vmem [#allocation7], %s382
        // Predicated region
        $region45: #{tpu_custom_call.1} parent=27 // pred_check
          %p384 = pneg %p92
        $region46: #{tpu_custom_call.1} parent=27 // pred_check_branch
          %386 = sbr.rel (%p384) target = $region48
        $region47: #{tpu_custom_call.1} parent=27 // pred_region
          %s388 = ssub.s32 128, 128
          %389 = vsyncadd %s380, %s388
          %s390 = smul.addr %s22, 128
          %s391 = scalar_lea.hbm %s2, %s390
          %s393 = sshll.u32 %s383, 4
          %s394 = int_to_ptr.vmem [resolvable:$true] %s393
          %396 = dma.vmem_to_hbm [thread:$0]  %s394, 128, %s391, %s380
        $region48: #{tpu_custom_call.1} parent=27 // pred_fallthru
          _
      $region28: #{tpu_custom_call.1} parent=5 // pred_fallthru
        _
      %p397 = scmp.le.s32.totalorder 2, %s17
      // Predicated region
      $region49: #{tpu_custom_call.1} parent=5 // pred_check
        %p398 = pneg %p397
      $region50: #{tpu_custom_call.1} parent=5 // pred_check_branch
        %400 = sbr.rel (%p398) target = $region52
      $region51: #{tpu_custom_call.1} parent=5 // pred_region
        %s401 = ssub.s32 %s17, 2
        // Predicated region
        $region53: #{tpu_custom_call.1} parent=51 // pred_check
          %p402 = pneg %p98
        $region54: #{tpu_custom_call.1} parent=51 // pred_check_branch
          %404 = sbr.rel (%p402) target = $region56
        $region55: #{tpu_custom_call.1} parent=51 // pred_region
          %s405 = sand.u32 %s83, 1
          %s406 = scalar_lea.sflag [#allocation4], %s405
          %s407 = sand.u32 %s83, 1
          %s408 = smul.addr %s407, 8
          %s409 = scalar_lea.vmem [#allocation7], %s408
          %410 = dma.done %s406, 128
        $region56: #{tpu_custom_call.1} parent=51 // pred_fallthru
          _
      $region52: #{tpu_custom_call.1} parent=5 // pred_fallthru
        _
    $region6: #{tpu_custom_call.1} parent=1 // loop_footer
      %s21 = sadd.s32 1, %s17
    $region7: #{tpu_custom_call.1} parent=1 // loop_footer_branch
      %16 = sbr.rel target = $region3
    $region8: #{tpu_custom_call.1} parent=1 // loop_exit
      _
    %411 = vsyncpa [#allocation3], 1
    %s412 = scalar_lea.sflag [#allocation3], 1
    %413 = vsyncpa %s412, 1
    %414 = vsyncpa [#allocation6], 1
    %s415 = scalar_lea.sflag [#allocation6], 1
    %416 = vsyncpa %s415, 1
    %417 = vsyncpa [#allocation4], 1
    %s418 = scalar_lea.sflag [#allocation4], 1
    %419 = vsyncpa %s418, 1

</llo_original>
